<compile_context>
chip_gen: v6e
topology: v6e:2x2x1
jax: 0.10.0
libtpu: 0.0.40
codegen_flags: <defaults>
</compile_context>

<pallas_src>
import functools

import jax
import jax.numpy as jnp
from jax.experimental import pallas as pl
from jax.experimental.pallas import tpu as pltpu

HIDDEN = 128
LANE = 128


def _round_up(x, m):
    return ((x + m - 1) // m) * m


def policy_mlp_kernel(x_ref, w1_ref, b1_ref, w2_ref, b2_ref, w3_ref, b3_ref, o_ref,
                      *, n_actions):
    # fc1 + ReLU  (bf16 MXU inputs, f32 accumulate; bias+ReLU in f32)
    x = x_ref[...].astype(jnp.bfloat16)
    h1 = jnp.dot(x, w1_ref[...], preferred_element_type=jnp.float32)
    h1 = jnp.maximum(h1 + b1_ref[...].astype(jnp.float32), 0.0)
    # fc2 + ReLU
    h2 = jnp.dot(h1.astype(jnp.bfloat16), w2_ref[...],
                 preferred_element_type=jnp.float32)
    h2 = jnp.maximum(h2 + b2_ref[...].astype(jnp.float32), 0.0)
    # fc3 logits: matmul against the 128-lane padded w3 (MXU friendly), but only the
    # first n_actions columns are written back (narrow, un-amplified HBM store).
    logits = jnp.dot(h2.astype(jnp.bfloat16), w3_ref[...],
                     preferred_element_type=jnp.float32)
    logits = logits + b3_ref[...].astype(jnp.float32)
    o_ref[...] = logits[:, :n_actions].astype(o_ref.dtype)


def policy_network_forward(state, params, n_actions, *, tm=1024):
    """state: [B, D_in] float32.  params: kernel-ready dict from init_params
    (bf16, transposed, w3/b3 already padded to a multiple of 128 columns).
    Returns [B, n_actions] float32 logits."""
    w1, b1, w2, b2, w3, b3 = (
        params["w1"], params["b1"], params["w2"],
        params["b2"], params["w3"], params["b3"],
    )
    B, d_in = state.shape
    H = w1.shape[1]
    n_pad = w3.shape[1]
    assert b3.shape == (1, n_pad) and b1.ndim == 2 and b2.ndim == 2

    # --- Batch tiling: tile is a multiple of 8 (sublane), capped to keep VMEM modest
    #     on v5e (16 MiB scoped default). ---
    tm = min(max(tm, 8), 4096)
    tm_eff = min(_round_up(tm, 8), _round_up(B, 8))
    # v7x: make sure the batch grid has >= 2 steps for sizeable batches so the
    # "parallel" grid axis can actually be sharded across both TensorCores.
    if _round_up(B, tm_eff) // tm_eff < 2 and B >= 256:
        tm_eff = max(8, _round_up(_round_up(B, 8) // 2, 8))
    b_pad = _round_up(B, tm_eff)
    if b_pad != B:
        state = jnp.pad(state, ((0, b_pad - B), (0, 0)))
    grid = (b_pad // tm_eff,)

    # Weights/biases: constant block index across the batch grid -> VMEM-resident.
    const = lambda shape: pl.BlockSpec(shape, lambda i: (0, 0))

    flops = 2 * b_pad * (d_in * H + H * H + H * n_pad)
    bytes_accessed = (
        4 * b_pad * d_in                                        # f32 state in
        + 2 * (d_in * H + H + H * H + H + H * n_pad + n_pad)    # bf16 weights/biases
        + 4 * b_pad * n_actions                                 # f32 logits out
    )

    kernel = functools.partial(policy_mlp_kernel, n_actions=n_actions)

    out = pl.pallas_call(
        kernel,
        out_shape=jax.ShapeDtypeStruct((b_pad, n_actions), jnp.float32),
        grid=grid,
        in_specs=[
            pl.BlockSpec((tm_eff, d_in), lambda i: (i, 0)),   # state tile per grid step
            const(w1.shape), const(b1.shape),
            const(w2.shape), const(b2.shape),
            const(w3.shape), const(b3.shape),
        ],
        out_specs=pl.BlockSpec((tm_eff, n_actions), lambda i: (i, 0)),
        compiler_params=pltpu.CompilerParams(
            dimension_semantics=("parallel",),                # shard batch grid over TCs
        ),
        cost_estimate=pl.CostEstimate(
            flops=flops, transcendentals=0, bytes_accessed=bytes_accessed),
    )(state, w1, b1, w2, b2, w3, b3)

    # Slice away the batch padding (padded rows are nonzero after bias+ReLU — discard).
    return out[:B]


def init_params(key, input_dims, n_actions, hidden=HIDDEN, dtype=jnp.bfloat16):
    """Deterministic init mimicking PyTorch nn.Linear default (uniform +/- 1/sqrt(fan_in)).
    Produces kernel-ready params ONCE: weights transposed to [fan_in, fan_out], cast to
    bf16 (MXU-native), and fc3 weight/bias zero-padded to a multiple of 128 columns so
    the padding / casting never runs in the RL inner loop."""
    def linear(k, fan_in, fan_out):
        kw, kb = jax.random.split(k)
        bound = 1.0 / jnp.sqrt(jnp.asarray(fan_in, jnp.float32))
        w = jax.random.uniform(kw, (fan_in, fan_out), jnp.float32, -bound, bound)
        b = jax.random.uniform(kb, (1, fan_out), jnp.float32, -bound, bound)
        return w.astype(dtype), b.astype(dtype)

    k1, k2, k3 = jax.random.split(key, 3)
    w1, b1 = linear(k1, input_dims, hidden)
    w2, b2 = linear(k2, hidden, hidden)
    w3, b3 = linear(k3, hidden, n_actions)

    n_pad = _round_up(n_actions, LANE)
    if n_pad != n_actions:
        w3 = jnp.pad(w3, ((0, 0), (0, n_pad - n_actions)))
        b3 = jnp.pad(b3, ((0, 0), (0, n_pad - n_actions)))
    return {"w1": w1, "b1": b1, "w2": w2, "b2": b2, "w3": w3, "b3": b3}


def reference_forward(state, params, n_actions):
    """Pure-JAX reference emulating the kernel's numerics (bf16 MXU inputs, f32 accum)."""
    bf = jnp.bfloat16
    h1 = jnp.dot(state.astype(bf), params["w1"],
                 preferred_element_type=jnp.float32) + params["b1"].astype(jnp.float32)
    h1 = jnp.maximum(h1, 0.0)
    h2 = jnp.dot(h1.astype(bf), params["w2"],
                 preferred_element_type=jnp.float32) + params["b2"].astype(jnp.float32)
    h2 = jnp.maximum(h2, 0.0)
    out = jnp.dot(h2.astype(bf), params["w3"],
                  preferred_element_type=jnp.float32) + params["b3"].astype(jnp.float32)
    return out[:, :n_actions]


if __name__ == "__main__":
    key = jax.random.PRNGKey(0)
    k_params, k_state, k_big = jax.random.split(key, 3)

    # LunarLander-like shapes: observation dim 8, 4 discrete actions.
    B, D_IN, N_ACTIONS = 2, 8, 4
    params = init_params(k_params, D_IN, N_ACTIONS)

    # Small-batch acting path (single grid step, batch padded 2 -> 8).
    state = jax.random.normal(k_state, (B, D_IN), jnp.float32)
    out = jax.block_until_ready(policy_network_forward(state, params, N_ACTIONS))
    ref = reference_forward(state, params, N_ACTIONS)
    assert out.shape == (B, N_ACTIONS)
    assert jnp.allclose(out, ref, atol=2e-2, rtol=2e-2), "mismatch vs reference (small batch)"

    # Batched path exercising the tiled grid (multiple steps + batch padding 300 -> 384).
    B2 = 300
    state2 = jax.random.normal(k_big, (B2, D_IN), jnp.float32)
    out2 = jax.block_until_ready(policy_network_forward(state2, params, N_ACTIONS, tm=128))
    ref2 = reference_forward(state2, params, N_ACTIONS)
    assert out2.shape == (B2, N_ACTIONS)
    assert jnp.allclose(out2, ref2, atol=2e-2, rtol=2e-2), "mismatch vs reference (batched)"

    # Large-batch default-tile path (tile auto-split so the grid has >=2 parallel steps).
    B3 = 1500
    state3 = jax.random.normal(k_big, (B3, D_IN), jnp.float32)
    out3 = jax.block_until_ready(policy_network_forward(state3, params, N_ACTIONS))
    ref3 = reference_forward(state3, params, N_ACTIONS)
    assert out3.shape == (B3, N_ACTIONS)
    assert jnp.allclose(out3, ref3, atol=2e-2, rtol=2e-2), "mismatch vs reference (large batch)"

    # TODO(synk): optionally fuse action selection (softmax/argmax over n_actions) into the
    # kernel epilogue to shrink the output writeback to (tm, 1) per tile.
    print("KERNEL_OK")
</pallas_src>

<mosaic_0001>
module attributes {stable_mosaic.version = 11 : i64} {
  func.func @policy_mlp_kernel(%arg0: i32, %arg1: memref<8x8xf32, #tpu.memory_space<vmem>>, %arg2: memref<8x128xbf16, #tpu.memory_space<vmem>>, %arg3: memref<1x128xbf16, #tpu.memory_space<vmem>>, %arg4: memref<128x128xbf16, #tpu.memory_space<vmem>>, %arg5: memref<1x128xbf16, #tpu.memory_space<vmem>>, %arg6: memref<128x128xbf16, #tpu.memory_space<vmem>>, %arg7: memref<1x128xbf16, #tpu.memory_space<vmem>>, %arg8: memref<8x4xf32, #tpu.memory_space<vmem>>) attributes {dimension_semantics = [#tpu.dimension_semantics<parallel>], iteration_bounds = array<i64: 1>, scalar_prefetch = 0 : i64, scratch_operands = 0 : i64, tpu.core_type = #tpu.core_type<tc>, window_params = [{transform_indices = @transform_0, window_bounds = array<i64: 8, 8>}, {pipeline_mode = #tpu.pipeline_mode<synchronous>, transform_indices = @transform_1, window_bounds = array<i64: 8, 128>}, {pipeline_mode = #tpu.pipeline_mode<synchronous>, transform_indices = @transform_2, window_bounds = array<i64: 1, 128>}, {pipeline_mode = #tpu.pipeline_mode<synchronous>, transform_indices = @transform_3, window_bounds = array<i64: 128, 128>}, {pipeline_mode = #tpu.pipeline_mode<synchronous>, transform_indices = @transform_4, window_bounds = array<i64: 1, 128>}, {pipeline_mode = #tpu.pipeline_mode<synchronous>, transform_indices = @transform_5, window_bounds = array<i64: 128, 128>}, {pipeline_mode = #tpu.pipeline_mode<synchronous>, transform_indices = @transform_6, window_bounds = array<i64: 1, 128>}, {transform_indices = @transform_7, window_bounds = array<i64: 8, 4>}]} {
    %c0 = arith.constant 0 : index
    %c0_0 = arith.constant 0 : index
    %0 = vector.load %arg1[%c0, %c0_0] : memref<8x8xf32, #tpu.memory_space<vmem>>, vector<8x8xf32>
    %1 = arith.truncf %0 : vector<8x8xf32> to vector<8x8xbf16>
    %c0_1 = arith.constant 0 : index
    %c0_2 = arith.constant 0 : index
    %2 = vector.load %arg2[%c0_1, %c0_2] : memref<8x128xbf16, #tpu.memory_space<vmem>>, vector<8x128xbf16>
    %cst = arith.constant dense<0.000000e+00> : vector<8x128xf32>
    %3 = tpu.matmul %1, %2, %cst {dimension_numbers = #tpu.dot_dimension_numbers<[1], [0], [0], [1], [0, 0, 1, 1], [], []>} : vector<8x8xbf16>, vector<8x128xbf16>, vector<8x128xf32> -> vector<8x128xf32>
    %c0_3 = arith.constant 0 : index
    %c0_4 = arith.constant 0 : index
    %4 = vector.load %arg3[%c0_3, %c0_4] : memref<1x128xbf16, #tpu.memory_space<vmem>>, vector<1x128xbf16>
    %5 = arith.extf %4 : vector<1x128xbf16> to vector<1x128xf32>
    %6 = vector.broadcast %5 : vector<1x128xf32> to vector<8x128xf32>
    %7 = arith.addf %3, %6 : vector<8x128xf32>
    %cst_5 = arith.constant 0.000000e+00 : f32
    %8 = vector.broadcast %cst_5 : f32 to vector<8x128xf32>
    %9 = arith.maximumf %7, %8 : vector<8x128xf32>
    %10 = arith.truncf %9 : vector<8x128xf32> to vector<8x128xbf16>
    %c0_6 = arith.constant 0 : index
    %c0_7 = arith.constant 0 : index
    %11 = vector.load %arg4[%c0_6, %c0_7] : memref<128x128xbf16, #tpu.memory_space<vmem>>, vector<128x128xbf16>
    %cst_8 = arith.constant dense<0.000000e+00> : vector<8x128xf32>
    %12 = tpu.matmul %10, %11, %cst_8 {dimension_numbers = #tpu.dot_dimension_numbers<[1], [0], [0], [1], [0, 0, 1, 1], [], []>} : vector<8x128xbf16>, vector<128x128xbf16>, vector<8x128xf32> -> vector<8x128xf32>
    %c0_9 = arith.constant 0 : index
    %c0_10 = arith.constant 0 : index
    %13 = vector.load %arg5[%c0_9, %c0_10] : memref<1x128xbf16, #tpu.memory_space<vmem>>, vector<1x128xbf16>
    %14 = arith.extf %13 : vector<1x128xbf16> to vector<1x128xf32>
    %15 = vector.broadcast %14 : vector<1x128xf32> to vector<8x128xf32>
    %16 = arith.addf %12, %15 : vector<8x128xf32>
    %cst_11 = arith.constant 0.000000e+00 : f32
    %17 = vector.broadcast %cst_11 : f32 to vector<8x128xf32>
    %18 = arith.maximumf %16, %17 : vector<8x128xf32>
    %19 = arith.truncf %18 : vector<8x128xf32> to vector<8x128xbf16>
    %c0_12 = arith.constant 0 : index
    %c0_13 = arith.constant 0 : index
    %20 = vector.load %arg6[%c0_12, %c0_13] : memref<128x128xbf16, #tpu.memory_space<vmem>>, vector<128x128xbf16>
    %cst_14 = arith.constant dense<0.000000e+00> : vector<8x128xf32>
    %21 = tpu.matmul %19, %20, %cst_14 {dimension_numbers = #tpu.dot_dimension_numbers<[1], [0], [0], [1], [0, 0, 1, 1], [], []>} : vector<8x128xbf16>, vector<128x128xbf16>, vector<8x128xf32> -> vector<8x128xf32>
    %c0_15 = arith.constant 0 : index
    %c0_16 = arith.constant 0 : index
    %22 = vector.load %arg7[%c0_15, %c0_16] : memref<1x128xbf16, #tpu.memory_space<vmem>>, vector<1x128xbf16>
    %23 = arith.extf %22 : vector<1x128xbf16> to vector<1x128xf32>
    %24 = vector.broadcast %23 : vector<1x128xf32> to vector<8x128xf32>
    %25 = arith.addf %21, %24 : vector<8x128xf32>
    %26 = vector.extract_strided_slice %25 {offsets = [0, 0], sizes = [8, 4], strides = [1, 1]} : vector<8x128xf32> to vector<8x4xf32>
    %c0_17 = arith.constant 0 : index
    %c0_18 = arith.constant 0 : index
    %27 = vector.load %arg8[%c0_17, %c0_18] : memref<8x4xf32, #tpu.memory_space<vmem>>, vector<8x4xf32>
    tpu.vector_store %arg8[%c0_17, %c0_18], %26 {strides = array<i32>} : memref<8x4xf32, #tpu.memory_space<vmem>>, vector<8x4xf32>,
    return
  }
  func.func @transform_0(%arg0: i32) -> (i32, i32) {
    %c0_i32 = arith.constant 0 : i32
    %c0_i32_0 = arith.constant 0 : i32
    return %arg0, %c0_i32 : i32, i32
  }
  func.func @transform_1(%arg0: i32) -> (i32, i32) {
    %c0_i32 = arith.constant 0 : i32
    %c0_i32_0 = arith.constant 0 : i32
    %c0_i32_1 = arith.constant 0 : i32
    return %c0_i32, %c0_i32_0 : i32, i32
  }
  func.func @transform_2(%arg0: i32) -> (i32, i32) {
    %c0_i32 = arith.constant 0 : i32
    %c0_i32_0 = arith.constant 0 : i32
    %c0_i32_1 = arith.constant 0 : i32
    return %c0_i32, %c0_i32_0 : i32, i32
  }
  func.func @transform_3(%arg0: i32) -> (i32, i32) {
    %c0_i32 = arith.constant 0 : i32
    %c0_i32_0 = arith.constant 0 : i32
    %c0_i32_1 = arith.constant 0 : i32
    return %c0_i32, %c0_i32_0 : i32, i32
  }
  func.func @transform_4(%arg0: i32) -> (i32, i32) {
    %c0_i32 = arith.constant 0 : i32
    %c0_i32_0 = arith.constant 0 : i32
    %c0_i32_1 = arith.constant 0 : i32
    return %c0_i32, %c0_i32_0 : i32, i32
  }
  func.func @transform_5(%arg0: i32) -> (i32, i32) {
    %c0_i32 = arith.constant 0 : i32
    %c0_i32_0 = arith.constant 0 : i32
    %c0_i32_1 = arith.constant 0 : i32
    return %c0_i32, %c0_i32_0 : i32, i32
  }
  func.func @transform_6(%arg0: i32) -> (i32, i32) {
    %c0_i32 = arith.constant 0 : i32
    %c0_i32_0 = arith.constant 0 : i32
    %c0_i32_1 = arith.constant 0 : i32
    return %c0_i32, %c0_i32_0 : i32, i32
  }
  func.func @transform_7(%arg0: i32) -> (i32, i32) {
    %c0_i32 = arith.constant 0 : i32
    %c0_i32_0 = arith.constant 0 : i32
    return %arg0, %c0_i32 : i32, i32
  }
}

</mosaic_0001>

<llo_original>
// kernel: tpu_custom_call.1
$region0: #{tpu_custom_call.1}
  #allocation0 [shape = 'u32[]', space=smem, size = 0x4, offset = 0x4, fixed_abs, tag = 'smem constant byte address 0x4 - core index']
  #allocation1 [shape = 'u32[144,128]{1,0:T(1,128)}', space=vmem, size = 0x12000, scoped, tag = 'internal scratch']
  %s0 = inlined_call_operand.hbm [shape: f32[8,8], index: 0, kind: input, shape index: {}]
  %s1 = inlined_call_operand.hbm [shape: bf16[8,128], index: 1, kind: input, shape index: {}]
  %s2 = inlined_call_operand.vmem [shape: bf16[1,128], index: 2, kind: input, shape index: {}]
  %s3 = inlined_call_operand.hbm [shape: bf16[128,128], index: 3, kind: input, shape index: {}]
  %s4 = inlined_call_operand.vmem [shape: bf16[1,128], index: 4, kind: input, shape index: {}]
  %s5 = inlined_call_operand.hbm [shape: bf16[128,128], index: 5, kind: input, shape index: {}]
  %s6 = inlined_call_operand.vmem [shape: bf16[1,128], index: 6, kind: input, shape index: {}]
  %s7 = inlined_call_operand.vmem [shape: f32[8,4], index: 7, kind: output, shape index: {}]
  %s8 = sld [smem:[#allocation0]]
  $region54: #{tpu_custom_call.1} parent=0
    _
  %s10 = ssub.s32 1, %s8
  %s11 = scalar_select 0, %s10, %s8
  $region1: #{tpu_custom_call.1} parent=0
    #allocation2 [shape = 'u8[4096]{0}', space=vmem, size = 0x1000, scoped, tag = 'input window, operand 0, single buffered']
    #allocation3 [shape = 's32[1]{0}', space=sflag, size = 0x4, scoped, tag = 'scoped memory for tpu_custom_call.1']
    #allocation4 [shape = 'u8[2048]{0}', space=vmem, size = 0x800, scoped, tag = 'input window, operand 1, single buffered']
    #allocation5 [shape = 's32[1]{0}', space=sflag, size = 0x4, scoped, tag = 'scoped memory for tpu_custom_call.1']
    #allocation6 [shape = 'u8[32768]{0}', space=vmem, size = 0x8000, scoped, tag = 'input window, operand 3, single buffered']
    #allocation7 [shape = 'u8[32768]{0}', space=vmem, size = 0x8000, scoped, tag = 'input window, operand 5, single buffered']
    #allocation8 [shape = 's32[1]{0}', space=sflag, size = 0x4, scoped, tag = 'scoped memory for tpu_custom_call.1']
    %12 = vsyncpa [#allocation3], 0
    %13 = vsyncpa [#allocation5], 0
    %14 = vsyncpa [#allocation8], 0
    // Predicated region
    $region2: #{tpu_custom_call.1} parent=1 // pred_check
      _
    $region3: #{tpu_custom_call.1} parent=1 // pred_check_branch
      %16 = sbr.rel (0) target = $region5
    $region4: #{tpu_custom_call.1} parent=1 // pred_region
      %s18 = ssub.s32 128, 128
      %19 = vsyncadd [#allocation3], %s18
      %s21 = sshll.u32 [#allocation2], 4
      %s22 = int_to_ptr.vmem [resolvable:$true] %s21
      %24 = dma.hbm_to_vmem [thread:$0]  %s0, 128, %s22, [#allocation3]
    $region5: #{tpu_custom_call.1} parent=1 // pred_fallthru
      _
    // Predicated region
    $region6: #{tpu_custom_call.1} parent=1 // pred_check
      _
    $region7: #{tpu_custom_call.1} parent=1 // pred_check_branch
      %26 = sbr.rel (0) target = $region9
    $region8: #{tpu_custom_call.1} parent=1 // pred_region
      %s28 = ssub.s32 64, 64
      %29 = vsyncadd [#allocation5], %s28
      %s31 = sshll.u32 [#allocation4], 4
      %s32 = int_to_ptr.vmem [resolvable:$true] %s31
      %34 = dma.hbm_to_vmem [thread:$0]  %s1, 64, %s32, [#allocation5]
    $region9: #{tpu_custom_call.1} parent=1 // pred_fallthru
      _
    // Predicated region
    $region10: #{tpu_custom_call.1} parent=1 // pred_check
      _
    $region11: #{tpu_custom_call.1} parent=1 // pred_check_branch
      %36 = sbr.rel (0) target = $region13
    $region12: #{tpu_custom_call.1} parent=1 // pred_region
      _
    $region13: #{tpu_custom_call.1} parent=1 // pred_fallthru
      _
    // Predicated region
    $region14: #{tpu_custom_call.1} parent=1 // pred_check
      _
    $region15: #{tpu_custom_call.1} parent=1 // pred_check_branch
      %38 = sbr.rel (0) target = $region17
    $region16: #{tpu_custom_call.1} parent=1 // pred_region
      %s40 = ssub.s32 1024, 1024
      %41 = vsyncadd [#allocation5], %s40
      %s42 = sshll.u32 [#allocation6], 4
      %s43 = int_to_ptr.vmem [resolvable:$true] %s42
      %48 = dma.hbm_to_vmem [thread:$0]  %s3, 1024, %s43, [#allocation5], 64, 64, 4
    $region17: #{tpu_custom_call.1} parent=1 // pred_fallthru
      _
    // Predicated region
    $region18: #{tpu_custom_call.1} parent=1 // pred_check
      _
    $region19: #{tpu_custom_call.1} parent=1 // pred_check_branch
      %50 = sbr.rel (0) target = $region21
    $region20: #{tpu_custom_call.1} parent=1 // pred_region
      _
    $region21: #{tpu_custom_call.1} parent=1 // pred_fallthru
      _
    // Predicated region
    $region22: #{tpu_custom_call.1} parent=1 // pred_check
      _
    $region23: #{tpu_custom_call.1} parent=1 // pred_check_branch
      %52 = sbr.rel (0) target = $region25
    $region24: #{tpu_custom_call.1} parent=1 // pred_region
      %s54 = ssub.s32 1024, 1024
      %55 = vsyncadd [#allocation8], %s54
      %s56 = sshll.u32 [#allocation7], 4
      %s57 = int_to_ptr.vmem [resolvable:$true] %s56
      %62 = dma.hbm_to_vmem [thread:$0]  %s5, 1024, %s57, [#allocation8], 64, 64, 4
    $region25: #{tpu_custom_call.1} parent=1 // pred_fallthru
      _
    // Predicated region
    $region26: #{tpu_custom_call.1} parent=1 // pred_check
      _
    $region27: #{tpu_custom_call.1} parent=1 // pred_check_branch
      %64 = sbr.rel (0) target = $region29
    $region28: #{tpu_custom_call.1} parent=1 // pred_region
      _
    $region29: #{tpu_custom_call.1} parent=1 // pred_fallthru
      _
    // Predicated region
    $region30: #{tpu_custom_call.1} parent=1 // pred_check
      _
    $region31: #{tpu_custom_call.1} parent=1 // pred_check_branch
      %66 = sbr.rel (0) target = $region33
    $region32: #{tpu_custom_call.1} parent=1 // pred_region
      %67 = dma.done [#allocation3], 128
    $region33: #{tpu_custom_call.1} parent=1 // pred_fallthru
      _
    // Predicated region
    $region34: #{tpu_custom_call.1} parent=1 // pred_check
      _
    $region35: #{tpu_custom_call.1} parent=1 // pred_check_branch
      %69 = sbr.rel (0) target = $region37
    $region36: #{tpu_custom_call.1} parent=1 // pred_region
      %70 = dma.done [#allocation5], 64
    $region37: #{tpu_custom_call.1} parent=1 // pred_fallthru
      _
    // Predicated region
    $region38: #{tpu_custom_call.1} parent=1 // pred_check
      _
    $region39: #{tpu_custom_call.1} parent=1 // pred_check_branch
      %72 = sbr.rel (0) target = $region41
    $region40: #{tpu_custom_call.1} parent=1 // pred_region
      %73 = dma.done [#allocation5], 1024
    $region41: #{tpu_custom_call.1} parent=1 // pred_fallthru
      _
    // Predicated region
    $region42: #{tpu_custom_call.1} parent=1 // pred_check
      _
    $region43: #{tpu_custom_call.1} parent=1 // pred_check_branch
      %75 = sbr.rel (0) target = $region45
    $region44: #{tpu_custom_call.1} parent=1 // pred_region
      %76 = dma.done [#allocation8], 1024
    $region45: #{tpu_custom_call.1} parent=1 // pred_fallthru
      _
    %v78 = vld [vmem:[#allocation2] sm:$0xff]
    %v79 = vpack.c.bf16 %v78, %v78
    %v80 = vld [vmem:[#allocation4] sm:$0xf]
    %v81 = vld [vmem:[%s2] sm:$0x1]
    %v82 = vunpack.c.l.bf16 %v81
    %v83 = vlaneseq
    %v84 = vshrl.u32 %v83, 7
    %v85 = vsub.s32 0, %v84
    %v86 = vrot.slane %v82, %v85
    %vm87 = vcmask 64512
    %v89 = vsel %vm87, %v79, 0
    %vm91 = vcmask 1043456
    %v93 = vsel %vm91, %v80, 0
    %95 = vmatprep.subr.bf16.mxu0 0
    %96 = vmatpush1.bf16.msra.mxu0 0
    %97 = vmatprep.subr.bf16.mxu0 0
    %98 = vmatpush1.bf16.msra.mxu0 0
    %99 = vmatprep.subr.bf16.mxu0 0
    %100 = vmatpush1.bf16.msra.mxu0 0
    %101 = vmatprep.subr.bf16.mxu0 0
    %102 = vmatpush1.bf16.msra.mxu0 0
    %103 = vmatprep.subr.bf16.mxu0 0
    %104 = vmatpush1.bf16.msra.mxu0 0
    %105 = vmatprep.subr.bf16.mxu0 0
    %106 = vmatpush1.bf16.msra.mxu0 0
    %107 = vmatprep.subr.bf16.mxu0 0
    %108 = vmatpush1.bf16.msra.mxu0 0
    %109 = vmatprep.subr.bf16.mxu0 0
    %110 = vmatpush1.bf16.msra.mxu0 %v93
    %111 = vmatprep.subr.bf16.mxu0 0
    %112 = vmatpush2.bf16.msra.mxu0 0
    %113 = vmatprep.subr.bf16.mxu0 0
    %114 = vmatpush2.bf16.msra.mxu0 0
    %115 = vmatprep.subr.bf16.mxu0 0
    %116 = vmatpush2.bf16.msra.mxu0 0
    %117 = vmatprep.subr.bf16.mxu0 0
    %118 = vmatpush2.bf16.msra.mxu0 0
    %119 = vmatprep.subr.bf16.mxu0 0
    %120 = vmatpush2.bf16.msra.mxu0 0
    %121 = vmatprep.subr.bf16.mxu0 0
    %122 = vmatpush2.bf16.msra.mxu0 0
    %123 = vmatprep.subr.bf16.mxu0 0
    %124 = vmatpush2.bf16.msra.mxu0 0
    %125 = vmatprep.subr.bf16.mxu0 0
    %126 = vmatpush2.bf16.msra.mxu0 0
    %127 = vmatprep.mubr.bf16.mxu0 0
    %128 = vmatmul.mubr.bf16.gmra.mxu0 %v89
    %v129 = vpop.f32.mrf.mxu0
    %v130 = vadd.f32 %v86, %v129
    %v131 = vpop.f32.mrf.mxu0
    %v132 = vpop.f32.mrf.mxu0
    %v133 = vpop.f32.mrf.mxu0
    %134 = vdwg.mxu0
    %v135 = vmax.f32 %v130, 0.0
    %v136 = vpack.c.bf16 %v135, %v135
    %v137 = vld [vmem:[#allocation6] sm:$0xf]
    %v138 = vld [vmem:[#allocation6 + $0x4] sm:$0xf]
    %v139 = vld [vmem:[#allocation6 + $0x8] sm:$0xf]
    %v140 = vld [vmem:[#allocation6 + $0xc] sm:$0xf]
    %v141 = vld [vmem:[#allocation6 + $0x10] sm:$0xf]
    %v142 = vld [vmem:[#allocation6 + $0x14] sm:$0xf]
    %v143 = vld [vmem:[#allocation6 + $0x18] sm:$0xf]
    %v144 = vld [vmem:[#allocation6 + $0x1c] sm:$0xf]
    %v145 = vld [vmem:[#allocation6 + $0x20] sm:$0xf]
    %v146 = vld [vmem:[#allocation6 + $0x24] sm:$0xf]
    %v147 = vld [vmem:[#allocation6 + $0x28] sm:$0xf]
    %v148 = vld [vmem:[#allocation6 + $0x2c] sm:$0xf]
    %v149 = vld [vmem:[#allocation6 + $0x30] sm:$0xf]
    %v150 = vld [vmem:[#allocation6 + $0x34] sm:$0xf]
    %v151 = vld [vmem:[#allocation6 + $0x38] sm:$0xf]
    %v152 = vld [vmem:[#allocation6 + $0x3c] sm:$0xf]
    %v153 = vld [vmem:[%s4] sm:$0x1]
    %v154 = vunpack.c.l.bf16 %v153
    %v155 = vlaneseq
    %v156 = vshrl.u32 %v155, 7
    %v157 = vsub.s32 0, %v156
    %v158 = vrot.slane %v154, %v157
    %v175 = vunpack.c.l.b16 %v137
    %v176 = vunpack.c.l.b16 %v138
    %v177 = vunpack.c.l.b16 %v139
    %v178 = vunpack.c.l.b16 %v140
    %v179 = vunpack.c.l.b16 %v141
    %v180 = vunpack.c.l.b16 %v142
    %v181 = vunpack.c.l.b16 %v143
    %v182 = vunpack.c.l.b16 %v144
    %v183 = vunpack.c.l.b16 %v145
    %v184 = vunpack.c.l.b16 %v146
    %v185 = vunpack.c.l.b16 %v147
    %v186 = vunpack.c.l.b16 %v148
    %v187 = vunpack.c.l.b16 %v149
    %v188 = vunpack.c.l.b16 %v150
    %v189 = vunpack.c.l.b16 %v151
    %v190 = vunpack.c.l.b16 %v152
    %v191 = vpack.c.b16 %v176, %v175
    %v192 = vpack.c.b16 %v178, %v177
    %v193 = vpack.c.b16 %v180, %v179
    %v194 = vpack.c.b16 %v182, %v181
    %v195 = vpack.c.b16 %v184, %v183
    %v196 = vpack.c.b16 %v186, %v185
    %v197 = vpack.c.b16 %v188, %v187
    %v198 = vpack.c.b16 %v190, %v189
    %207 = vmatprep.subr.bf16.mxu0 0
    %208 = vmatpush1.bf16.msra.mxu0 %v198
    %209 = vmatprep.subr.bf16.mxu0 0
    %210 = vmatpush1.bf16.msra.mxu0 %v197
    %211 = vmatprep.subr.bf16.mxu0 0
    %212 = vmatpush1.bf16.msra.mxu0 %v196
    %213 = vmatprep.subr.bf16.mxu0 0
    %214 = vmatpush1.bf16.msra.mxu0 %v195
    %215 = vmatprep.subr.bf16.mxu0 0
    %216 = vmatpush1.bf16.msra.mxu0 %v194
    %217 = vmatprep.subr.bf16.mxu0 0
    %218 = vmatpush1.bf16.msra.mxu0 %v193
    %219 = vmatprep.subr.bf16.mxu0 0
    %220 = vmatpush1.bf16.msra.mxu0 %v192
    %221 = vmatprep.subr.bf16.mxu0 0
    %222 = vmatpush1.bf16.msra.mxu0 %v191
    %223 = vmatprep.subr.bf16.mxu0 0
    %224 = vmatpush2.bf16.msra.mxu0 0
    %225 = vmatprep.subr.bf16.mxu0 0
    %226 = vmatpush2.bf16.msra.mxu0 0
    %227 = vmatprep.subr.bf16.mxu0 0
    %228 = vmatpush2.bf16.msra.mxu0 0
    %229 = vmatprep.subr.bf16.mxu0 0
    %230 = vmatpush2.bf16.msra.mxu0 0
    %231 = vmatprep.subr.bf16.mxu0 0
    %232 = vmatpush2.bf16.msra.mxu0 0
    %233 = vmatprep.subr.bf16.mxu0 0
    %234 = vmatpush2.bf16.msra.mxu0 0
    %235 = vmatprep.subr.bf16.mxu0 0
    %236 = vmatpush2.bf16.msra.mxu0 0
    %237 = vmatprep.subr.bf16.mxu0 0
    %238 = vmatpush2.bf16.msra.mxu0 0
    %239 = vmatprep.mubr.bf16.mxu0 0
    %240 = vmatmul.mubr.bf16.gmra.mxu0 %v136
    %v241 = vpop.f32.mrf.mxu0
    %v242 = vadd.f32 %v158, %v241
    %v243 = vpop.f32.mrf.mxu0
    %v244 = vpop.f32.mrf.mxu0
    %v245 = vpop.f32.mrf.mxu0
    %246 = vdwg.mxu0
    %v247 = vmax.f32 %v242, 0.0
    %v248 = vpack.c.bf16 %v247, %v247
    %v249 = vld [vmem:[#allocation7] sm:$0xf]
    %v250 = vld [vmem:[#allocation7 + $0x4] sm:$0xf]
    %v251 = vld [vmem:[#allocation7 + $0x8] sm:$0xf]
    %v252 = vld [vmem:[#allocation7 + $0xc] sm:$0xf]
    %v253 = vld [vmem:[#allocation7 + $0x10] sm:$0xf]
    %v254 = vld [vmem:[#allocation7 + $0x14] sm:$0xf]
    %v255 = vld [vmem:[#allocation7 + $0x18] sm:$0xf]
    %v256 = vld [vmem:[#allocation7 + $0x1c] sm:$0xf]
    %v257 = vld [vmem:[#allocation7 + $0x20] sm:$0xf]
    %v258 = vld [vmem:[#allocation7 + $0x24] sm:$0xf]
    %v259 = vld [vmem:[#allocation7 + $0x28] sm:$0xf]
    %v260 = vld [vmem:[#allocation7 + $0x2c] sm:$0xf]
    %v261 = vld [vmem:[#allocation7 + $0x30] sm:$0xf]
    %v262 = vld [vmem:[#allocation7 + $0x34] sm:$0xf]
    %v263 = vld [vmem:[#allocation7 + $0x38] sm:$0xf]
    %v264 = vld [vmem:[#allocation7 + $0x3c] sm:$0xf]
    %v265 = vld [vmem:[%s6] sm:$0x1]
    %v266 = vunpack.c.l.bf16 %v265
    %v267 = vlaneseq
    %v268 = vshrl.u32 %v267, 7
    %v269 = vsub.s32 0, %v268
    %v270 = vrot.slane %v266, %v269
    %v287 = vunpack.c.l.b16 %v249
    %v288 = vunpack.c.l.b16 %v250
    %v289 = vunpack.c.l.b16 %v251
    %v290 = vunpack.c.l.b16 %v252
    %v291 = vunpack.c.l.b16 %v253
    %v292 = vunpack.c.l.b16 %v254
    %v293 = vunpack.c.l.b16 %v255
    %v294 = vunpack.c.l.b16 %v256
    %v295 = vunpack.c.l.b16 %v257
    %v296 = vunpack.c.l.b16 %v258
    %v297 = vunpack.c.l.b16 %v259
    %v298 = vunpack.c.l.b16 %v260
    %v299 = vunpack.c.l.b16 %v261
    %v300 = vunpack.c.l.b16 %v262
    %v301 = vunpack.c.l.b16 %v263
    %v302 = vunpack.c.l.b16 %v264
    %v303 = vpack.c.b16 %v288, %v287
    %v304 = vpack.c.b16 %v290, %v289
    %v305 = vpack.c.b16 %v292, %v291
    %v306 = vpack.c.b16 %v294, %v293
    %v307 = vpack.c.b16 %v296, %v295
    %v308 = vpack.c.b16 %v298, %v297
    %v309 = vpack.c.b16 %v300, %v299
    %v310 = vpack.c.b16 %v302, %v301
    %319 = vmatprep.subr.bf16.mxu0 0
    %320 = vmatpush1.bf16.msra.mxu0 %v310
    %321 = vmatprep.subr.bf16.mxu0 0
    %322 = vmatpush1.bf16.msra.mxu0 %v309
    %323 = vmatprep.subr.bf16.mxu0 0
    %324 = vmatpush1.bf16.msra.mxu0 %v308
    %325 = vmatprep.subr.bf16.mxu0 0
    %326 = vmatpush1.bf16.msra.mxu0 %v307
    %327 = vmatprep.subr.bf16.mxu0 0
    %328 = vmatpush1.bf16.msra.mxu0 %v306
    %329 = vmatprep.subr.bf16.mxu0 0
    %330 = vmatpush1.bf16.msra.mxu0 %v305
    %331 = vmatprep.subr.bf16.mxu0 0
    %332 = vmatpush1.bf16.msra.mxu0 %v304
    %333 = vmatprep.subr.bf16.mxu0 0
    %334 = vmatpush1.bf16.msra.mxu0 %v303
    %335 = vmatprep.subr.bf16.mxu0 0
    %336 = vmatpush2.bf16.msra.mxu0 0
    %337 = vmatprep.subr.bf16.mxu0 0
    %338 = vmatpush2.bf16.msra.mxu0 0
    %339 = vmatprep.subr.bf16.mxu0 0
    %340 = vmatpush2.bf16.msra.mxu0 0
    %341 = vmatprep.subr.bf16.mxu0 0
    %342 = vmatpush2.bf16.msra.mxu0 0
    %343 = vmatprep.subr.bf16.mxu0 0
    %344 = vmatpush2.bf16.msra.mxu0 0
    %345 = vmatprep.subr.bf16.mxu0 0
    %346 = vmatpush2.bf16.msra.mxu0 0
    %347 = vmatprep.subr.bf16.mxu0 0
    %348 = vmatpush2.bf16.msra.mxu0 0
    %349 = vmatprep.subr.bf16.mxu0 0
    %350 = vmatpush2.bf16.msra.mxu0 0
    %351 = vmatprep.mubr.bf16.mxu0 0
    %352 = vmatmul.mubr.bf16.gmra.mxu0 %v248
    %v353 = vpop.f32.mrf.mxu0
    %v354 = vadd.f32 %v270, %v353
    %v355 = vpop.f32.mrf.mxu0
    %v356 = vpop.f32.mrf.mxu0
    %v357 = vpop.f32.mrf.mxu0
    %358 = vdwg.mxu0
    %vm359 = vcmask 31744
    %360 = vst.msk [vmem:[%s7] sm:$0xff] %vm359, %v354
    // Predicated region
    $region46: #{tpu_custom_call.1} parent=1 // pred_check
      _
    $region47: #{tpu_custom_call.1} parent=1 // pred_check_branch
      %362 = sbr.rel (0) target = $region49
    $region48: #{tpu_custom_call.1} parent=1 // pred_region
      _
    $region49: #{tpu_custom_call.1} parent=1 // pred_fallthru
      _
    // Predicated region
    $region50: #{tpu_custom_call.1} parent=1 // pred_check
      _
    $region51: #{tpu_custom_call.1} parent=1 // pred_check_branch
      %364 = sbr.rel (0) target = $region53
    $region52: #{tpu_custom_call.1} parent=1 // pred_region
      _
    $region53: #{tpu_custom_call.1} parent=1 // pred_fallthru
      _
    %365 = vsyncpa [#allocation3], 1
    %366 = vsyncpa [#allocation5], 1
    %367 = vsyncpa [#allocation8], 1

</llo_original>
